<compile_context>
chip_gen: v6e
topology: v6e:2x2x1
jax: 0.10.0
libtpu: 0.0.40
codegen_flags: <defaults>
</compile_context>

<pallas_src>
import jax
import jax.numpy as jnp
from jax.experimental import pallas as pl
from jax.experimental.pallas import tpu as pltpu

_LANE = 128
_SUBLANE_F32 = 8
_BUF_BUDGET_BYTES = 24 * 1024 * 1024   # double-buffered pipeline blocks (all gens)
_VMEM_LIMIT_BYTES = 40 * 1024 * 1024   # < 64 MiB v7x physical, > 16/32 MiB defaults


def _round_up(n, m):
    return ((n + m - 1) // m) * m


def _exp_decay_kernel(params_ref, x_ref, y_ref, o_ref):
    """One batch tile.

    params_ref : SMEM (2,) f32  -> [alpha*beta, -beta]  (host-precomputed)
    x_ref      : VMEM (TB, D)   native input dtype
    y_ref      : VMEM (TB, D)   native input dtype
    o_ref      : VMEM (TB, 1)   f32
    """
    ab = params_ref[0]
    neg_beta = params_ref[1]
    # Upcast after the load: no-op for f32, exact for bf16 (v5e VPU has no bf16).
    xf = x_ref[...].astype(jnp.float32)
    yf = y_ref[...].astype(jnp.float32)
    dist = jnp.sum(jnp.abs(xf - yf), axis=-1, keepdims=True)   # (TB, 1)  VPU + XLU
    o_ref[...] = ab * jnp.exp(neg_beta * dist)                 # EUP exp + VPU scale


def _choose_tile_b(B, D, itemsize):
    """Largest sublane-aligned batch tile fitting the VMEM pipeline budget."""
    sublane = _SUBLANE_F32 * max(1, 4 // itemsize)       # bf16 packs 16 rows / vreg
    d_pad = _round_up(max(D, 1), _LANE)                  # lane padding in VMEM
    # 2 inputs x 2 pipeline buffers + the double-buffered (TB, 1) f32 output block.
    bytes_per_row = 2 * 2 * d_pad * itemsize + 2 * _LANE * 4
    tile = max(sublane, (_BUF_BUDGET_BYTES // bytes_per_row) // sublane * sublane)
    # Keep the grid length >= 2 so both v7x TensorCores get work.
    if B > sublane:
        tile = min(tile, _round_up(-(-B // 2), sublane))
    tile = min(tile, _round_up(B, sublane))
    # Prefer a tile that divides B exactly (avoids a padding copy of the inputs),
    # but never shrink below 1/4 of the VMEM-derived tile.
    for t in range(tile, max(sublane, tile // 4) - 1, -sublane):
        if B % t == 0:
            return t
    return tile


def exponential_decaying_kernel(x, y, alpha, beta, *, tile_b=None):
    """Pallas version of ExponentialDecayingKernel.forward."""
    x = jnp.asarray(x)
    y = jnp.asarray(y)
    assert x.ndim == 2 and x.shape == y.shape, "x, y must be [batch, data_dim]"
    if x.dtype != y.dtype:
        ct = jnp.promote_types(x.dtype, y.dtype)
        x, y = x.astype(ct), y.astype(ct)
    B, D = x.shape
    itemsize = jnp.dtype(x.dtype).itemsize

    if tile_b is None:
        tile_b = _choose_tile_b(B, D, itemsize)
    num_tiles = -(-B // tile_b)
    B_pad = num_tiles * tile_b
    if B_pad != B:                      # pad-and-slice for non-tile-aligned batches
        x = jnp.pad(x, ((0, B_pad - B), (0, 0)))
        y = jnp.pad(y, ((0, B_pad - B), (0, 0)))

    # Host-side precompute: removes a per-element multiply inside the kernel.
    alpha = jnp.asarray(alpha, jnp.float32)
    beta = jnp.asarray(beta, jnp.float32)
    params = jnp.stack([alpha * beta, -beta])

    cost = pl.CostEstimate(
        flops=3 * B_pad * D + 2 * B_pad,
        transcendentals=B_pad,
        bytes_accessed=2 * B_pad * D * itemsize + 4 * B_pad,
    )

    out2d = pl.pallas_call(
        _exp_decay_kernel,
        out_shape=jax.ShapeDtypeStruct((B_pad, 1), jnp.float32),
        grid_spec=pltpu.PrefetchScalarGridSpec(
            num_scalar_prefetch=0,
            grid=(num_tiles,),
            in_specs=[
                pl.BlockSpec(memory_space=pltpu.MemorySpace.SMEM),  # [a*b, -b]
                pl.BlockSpec((tile_b, D), lambda i: (i, 0)),
                pl.BlockSpec((tile_b, D), lambda i: (i, 0)),
            ],
            out_specs=pl.BlockSpec((tile_b, 1), lambda i: (i, 0)),
        ),
        compiler_params=pltpu.CompilerParams(
            dimension_semantics=("parallel",),
            vmem_limit_bytes=_VMEM_LIMIT_BYTES,
        ),
        cost_estimate=cost,
    )(params, x, y)

    return out2d[:B, 0]


def _reference(x, y, alpha, beta):
    x = x.astype(jnp.float32)
    y = y.astype(jnp.float32)
    return alpha * beta * jnp.exp(-beta * jnp.abs(x - y).sum(-1))


if __name__ == "__main__":
    alpha, beta = 0.8, 0.5              # module __init__ scalars
    key = jax.random.PRNGKey(0)
    kx, ky, kx2, ky2 = jax.random.split(key, 4)

    # Spatio-temporal events: data_dim = 3 (t, sx, sy); f32, tile-aligned batch.
    B, D = 16, 3
    x = jax.random.normal(kx, (B, D), dtype=jnp.float32)
    y = jax.random.normal(ky, (B, D), dtype=jnp.float32)
    out = jax.block_until_ready(exponential_decaying_kernel(x, y, alpha, beta))
    ref = _reference(x, y, alpha, beta)
    assert out.shape == (B,)
    assert jnp.allclose(out, ref, rtol=1e-4, atol=1e-6), "f32 mismatch vs reference"

    # bf16 inputs (streamed without a wrapper-side f32 cast) + non-aligned batch.
    B2, D2 = 13, 5
    x2 = jax.random.normal(kx2, (B2, D2), dtype=jnp.bfloat16)
    y2 = jax.random.normal(ky2, (B2, D2), dtype=jnp.bfloat16)
    out2 = jax.block_until_ready(exponential_decaying_kernel(x2, y2, alpha, beta))
    ref2 = _reference(x2, y2, alpha, beta)
    assert out2.shape == (B2,)
    assert jnp.allclose(out2, ref2, rtol=1e-3, atol=1e-6), "bf16 mismatch vs reference"

    print("KERNEL_OK")
</pallas_src>

<mosaic_0001>
module attributes {stable_mosaic.version = 11 : i64} {
  func.func @_exp_decay_kernel(%arg0: i32, %arg1: memref<2xf32, #tpu.memory_space<smem>>, %arg2: memref<8x3xf32, #tpu.memory_space<vmem>>, %arg3: memref<8x3xf32, #tpu.memory_space<vmem>>, %arg4: memref<8x1xf32, #tpu.memory_space<vmem>>) attributes {dimension_semantics = [#tpu.dimension_semantics<parallel>], iteration_bounds = array<i64: 2>, scalar_prefetch = 0 : i64, scratch_operands = 0 : i64, tpu.core_type = #tpu.core_type<tc>, window_params = [{transform_indices = @transform_0, window_bounds = array<i64: 2>}, {transform_indices = @transform_1, window_bounds = array<i64: 8, 3>}, {transform_indices = @transform_2, window_bounds = array<i64: 8, 3>}, {transform_indices = @transform_3, window_bounds = array<i64: 8, 1>}]} {
    %c0 = arith.constant 0 : index
    %0 = memref.load %arg1[%c0] : memref<2xf32, #tpu.memory_space<smem>>
    %c1 = arith.constant 1 : index
    %1 = memref.load %arg1[%c1] : memref<2xf32, #tpu.memory_space<smem>>
    %c0_0 = arith.constant 0 : index
    %c0_1 = arith.constant 0 : index
    %2 = vector.load %arg2[%c0_0, %c0_1] : memref<8x3xf32, #tpu.memory_space<vmem>>, vector<8x3xf32>
    %c0_2 = arith.constant 0 : index
    %c0_3 = arith.constant 0 : index
    %3 = vector.load %arg3[%c0_2, %c0_3] : memref<8x3xf32, #tpu.memory_space<vmem>>, vector<8x3xf32>
    %4 = arith.subf %2, %3 : vector<8x3xf32>
    %5 = math.absf %4 : vector<8x3xf32>
    %cst = arith.constant dense<0.000000e+00> : vector<8xf32>
    %6 = vector.multi_reduction <add>, %5, %cst [1] : vector<8x3xf32> to vector<8xf32>
    %7 = vector.shape_cast %6 : vector<8xf32> to vector<8x1xf32>
    %8 = vector.broadcast %1 : f32 to vector<8x1xf32>
    %9 = arith.mulf %8, %7 : vector<8x1xf32>
    %10 = math.exp %9 : vector<8x1xf32>
    %11 = vector.broadcast %0 : f32 to vector<8x1xf32>
    %12 = arith.mulf %11, %10 : vector<8x1xf32>
    %c0_4 = arith.constant 0 : index
    %c0_5 = arith.constant 0 : index
    %13 = vector.load %arg4[%c0_4, %c0_5] : memref<8x1xf32, #tpu.memory_space<vmem>>, vector<8x1xf32>
    tpu.vector_store %arg4[%c0_4, %c0_5], %12 {strides = array<i32>} : memref<8x1xf32, #tpu.memory_space<vmem>>, vector<8x1xf32>,
    return
  }
  func.func @transform_0(%arg0: i32) -> i32 {
    %c0_i32 = arith.constant 0 : i32
    %c0_i32_0 = arith.constant 0 : i32
    return %c0_i32 : i32
  }
  func.func @transform_1(%arg0: i32) -> (i32, i32) {
    %c0_i32 = arith.constant 0 : i32
    %c0_i32_0 = arith.constant 0 : i32
    return %arg0, %c0_i32 : i32, i32
  }
  func.func @transform_2(%arg0: i32) -> (i32, i32) {
    %c0_i32 = arith.constant 0 : i32
    %c0_i32_0 = arith.constant 0 : i32
    return %arg0, %c0_i32 : i32, i32
  }
  func.func @transform_3(%arg0: i32) -> (i32, i32) {
    %c0_i32 = arith.constant 0 : i32
    %c0_i32_0 = arith.constant 0 : i32
    return %arg0, %c0_i32 : i32, i32
  }
}

</mosaic_0001>

<llo_original>
// kernel: tpu_custom_call.1
$region0: #{tpu_custom_call.1}
  #allocation0 [shape = 'u32[]', space=smem, size = 0x4, offset = 0x4, fixed_abs, tag = 'smem constant byte address 0x4 - core index']
  #allocation1 [shape = 'u32[144,128]{1,0:T(1,128)}', space=vmem, size = 0x12000, scoped, tag = 'internal scratch']
  %s0 = inlined_call_operand.vmem [shape: f32[2], index: 0, kind: input, shape index: {}]
  %s1 = inlined_call_operand.vmem [shape: f32[16,3], index: 1, kind: input, shape index: {}]
  %s2 = inlined_call_operand.vmem [shape: f32[16,3], index: 2, kind: input, shape index: {}]
  %s3 = inlined_call_operand.vmem [shape: f32[16,1], index: 3, kind: output, shape index: {}]
  %s4 = sld [smem:[#allocation0]]
  $region49: #{tpu_custom_call.1} parent=0
    _
  %s6 = ssub.s32 1, %s4
  %s7 = scalar_select 0, %s6, %s4
  $region1: #{tpu_custom_call.1} parent=0
    #allocation2 [shape = 'u8[512]{0}', space=smem, size = 0x200, scoped, tag = 'input window, operand 0, single buffered']
    #allocation3 [shape = 's32[2]{0}', space=sflag, size = 0x8, scoped, tag = 'scoped memory for tpu_custom_call.1']
    %8 = vsyncpa [#allocation3], 0
    loop: start=0, step=1, limit=4
    $region2: #{tpu_custom_call.1} parent=1 // loop_pre_header
      _
    $region3: #{tpu_custom_call.1} parent=1 // loop_header
      %s10 = sphi 0, %s14
      %p11 = scmp.ge.s32.totalorder %s10, 4
      %s18 = sphi 0, %s18
      %s20 = sphi 0, %s18
      %s21 = sphi 0, %s20
      %s35 = sphi 0, %s21
      %s41 = sphi 0, %s43
      %s44 = sphi 0, %s41
      %s45 = sphi 0, %s44
      %s61 = sphi 0, %s45
      %s67 = sphi 0, %s69
      %s70 = sphi 0, %s67
      %s71 = sphi 0, %s70
      %s87 = sphi 0, %s71
      %s93 = sphi 0, %s95
      %s96 = sphi 0, %s93
      %s97 = sphi 0, %s96
      %s113 = sphi 0, %s97
    $region4: #{tpu_custom_call.1} parent=1 // loop_header_branch
      %13 = sbr.rel (%p11) target = $region8
    $region5: #{tpu_custom_call.1} parent=1 // loop_body
      %s15 = ssub.s32 %s10, 1
      %s16 = ssub.s32 %s10, 2
      %s17 = sadd.s32 %s10, 1
      %s19 = sadd.s32 %s18, 1
      %p22 = scmp.eq.s32.totalorder %s10, 1
      %p23 = scmp.ne.s32.totalorder %s18, %s20
      %p24 = scmp.eq.s32.totalorder %s10, 0
      %p25 = por %p23, %p24
      %p26 = scmp.ne.s32.totalorder %s18, %s20
      %p27 = scmp.eq.s32.totalorder %s15, 1
      %p28 = por %p26, %p27
      %p29 = scmp.ne.s32.totalorder %s20, %s21
      %p30 = scmp.eq.s32.totalorder %s15, 0
      %p31 = por %p29, %p30
      %p32 = scmp.ne.s32.totalorder %s20, %s21
      %p33 = scmp.eq.s32.totalorder %s16, 1
      %p34 = por %p32, %p33
      %p36 = scmp.ne.s32.totalorder %s21, %s35
      %p37 = scmp.eq.s32.totalorder %s16, 0
      %p38 = por %p36, %p37
      %s39 = ssub.s32 %s10, %s17
      %p40 = scmp.eq.s32.totalorder %s39, 0
      %s42 = sadd.s32 %s41, 1
      %s43 = scalar_select %p40, %s41, %s42
      %p46 = pneg %p40
      %p47 = scmp.eq.s32.totalorder %s10, 1
      %p48 = por %p46, %p47
      %p49 = scmp.ne.s32.totalorder %s41, %s44
      %p50 = scmp.eq.s32.totalorder %s10, 0
      %p51 = por %p49, %p50
      %p52 = scmp.ne.s32.totalorder %s41, %s44
      %p53 = scmp.eq.s32.totalorder %s15, 1
      %p54 = por %p52, %p53
      %p55 = scmp.ne.s32.totalorder %s44, %s45
      %p56 = scmp.eq.s32.totalorder %s15, 0
      %p57 = por %p55, %p56
      %p58 = scmp.ne.s32.totalorder %s44, %s45
      %p59 = scmp.eq.s32.totalorder %s16, 1
      %p60 = por %p58, %p59
      %p62 = scmp.ne.s32.totalorder %s45, %s61
      %p63 = scmp.eq.s32.totalorder %s16, 0
      %p64 = por %p62, %p63
      %s65 = ssub.s32 %s10, %s17
      %p66 = scmp.eq.s32.totalorder %s65, 0
      %s68 = sadd.s32 %s67, 1
      %s69 = scalar_select %p66, %s67, %s68
      %p72 = pneg %p66
      %p73 = scmp.eq.s32.totalorder %s10, 1
      %p74 = por %p72, %p73
      %p75 = scmp.ne.s32.totalorder %s67, %s70
      %p76 = scmp.eq.s32.totalorder %s10, 0
      %p77 = por %p75, %p76
      %p78 = scmp.ne.s32.totalorder %s67, %s70
      %p79 = scmp.eq.s32.totalorder %s15, 1
      %p80 = por %p78, %p79
      %p81 = scmp.ne.s32.totalorder %s70, %s71
      %p82 = scmp.eq.s32.totalorder %s15, 0
      %p83 = por %p81, %p82
      %p84 = scmp.ne.s32.totalorder %s70, %s71
      %p85 = scmp.eq.s32.totalorder %s16, 1
      %p86 = por %p84, %p85
      %p88 = scmp.ne.s32.totalorder %s71, %s87
      %p89 = scmp.eq.s32.totalorder %s16, 0
      %p90 = por %p88, %p89
      %s91 = ssub.s32 %s10, %s17
      %p92 = scmp.eq.s32.totalorder %s91, 0
      %s94 = sadd.s32 %s93, 1
      %s95 = scalar_select %p92, %s93, %s94
      %p98 = pneg %p92
      %p99 = scmp.eq.s32.totalorder %s10, 1
      %p100 = por %p98, %p99
      %p101 = scmp.ne.s32.totalorder %s93, %s96
      %p102 = scmp.eq.s32.totalorder %s10, 0
      %p103 = por %p101, %p102
      %p104 = scmp.ne.s32.totalorder %s93, %s96
      %p105 = scmp.eq.s32.totalorder %s15, 1
      %p106 = por %p104, %p105
      %p107 = scmp.ne.s32.totalorder %s96, %s97
      %p108 = scmp.eq.s32.totalorder %s15, 0
      %p109 = por %p107, %p108
      %p110 = scmp.ne.s32.totalorder %s96, %s97
      %p111 = scmp.eq.s32.totalorder %s16, 1
      %p112 = por %p110, %p111
      %p114 = scmp.ne.s32.totalorder %s97, %s113
      %p115 = scmp.eq.s32.totalorder %s16, 0
      %p116 = por %p114, %p115
      %p117 = scmp.le.s32.totalorder 1, %s10
      %p118 = scmp.lt.s32.totalorder %s10, 3
      %p119 = pnand %p117, %p118
      %p120 = pneg %p119
      // Predicated region
      $region9: #{tpu_custom_call.1} parent=5 // pred_check
        _
      $region10: #{tpu_custom_call.1} parent=5 // pred_check_branch
        %122 = sbr.rel (%p119) target = $region12
      $region11: #{tpu_custom_call.1} parent=5 // pred_region
        %s123 = ssub.s32 %s10, 1
        // Predicated region
        $region13: #{tpu_custom_call.1} parent=11 // pred_check
          %p124 = pneg %p31
        $region14: #{tpu_custom_call.1} parent=11 // pred_check_branch
          %126 = sbr.rel (%p124) target = $region16
        $region15: #{tpu_custom_call.1} parent=11 // pred_region
          %s128 = ssub.s32 16, 16
          %129 = vsyncadd [#allocation3], %s128
          %s131 = sshll.u32 %s0, 4
          %s132 = int_to_ptr.vmem [resolvable:$true] %s131
          %134 = dma.vmem_to_smem %s132, 16, [#allocation2], [#allocation3]
        $region16: #{tpu_custom_call.1} parent=11 // pred_fallthru
          _
      $region12: #{tpu_custom_call.1} parent=5 // pred_fallthru
        _
      %p135 = scmp.lt.s32.totalorder %s10, 2
      // Predicated region
      $region17: #{tpu_custom_call.1} parent=5 // pred_check
        %p136 = pneg %p135
      $region18: #{tpu_custom_call.1} parent=5 // pred_check_branch
        %138 = sbr.rel (%p136) target = $region20
      $region19: #{tpu_custom_call.1} parent=5 // pred_region
        // Predicated region
        $region21: #{tpu_custom_call.1} parent=19 // pred_check
          %p139 = pneg %p51
        $region22: #{tpu_custom_call.1} parent=19 // pred_check_branch
          %141 = sbr.rel (%p139) target = $region24
        $region23: #{tpu_custom_call.1} parent=19 // pred_region
          %p142 = scmp.lt.s32.totalorder %s10, 1
          %s143 = scalar_select %p142, %s10, 1
          %s144 = smul.addr %s143, 8
          %s145 = scalar_lea.vmem %s1, %s144
        $region24: #{tpu_custom_call.1} parent=19 // pred_fallthru
          _
        // Predicated region
        $region25: #{tpu_custom_call.1} parent=19 // pred_check
          %p146 = pneg %p77
        $region26: #{tpu_custom_call.1} parent=19 // pred_check_branch
          %148 = sbr.rel (%p146) target = $region28
        $region27: #{tpu_custom_call.1} parent=19 // pred_region
          %p149 = scmp.lt.s32.totalorder %s10, 1
          %s150 = scalar_select %p149, %s10, 1
          %s151 = smul.addr %s150, 8
          %s152 = scalar_lea.vmem %s2, %s151
        $region28: #{tpu_custom_call.1} parent=19 // pred_fallthru
          _
      $region20: #{tpu_custom_call.1} parent=5 // pred_fallthru
        _
      %p153 = scmp.le.s32.totalorder 1, %s10
      %p154 = scmp.lt.s32.totalorder %s10, 3
      %p155 = pnand %p153, %p154
      %p156 = pneg %p155
      // Predicated region
      $region29: #{tpu_custom_call.1} parent=5 // pred_check
        _
      $region30: #{tpu_custom_call.1} parent=5 // pred_check_branch
        %158 = sbr.rel (%p155) target = $region32
      $region31: #{tpu_custom_call.1} parent=5 // pred_region
        %s159 = ssub.s32 %s10, 1
        // Predicated region
        $region33: #{tpu_custom_call.1} parent=31 // pred_check
          %p160 = pneg %p31
        $region34: #{tpu_custom_call.1} parent=31 // pred_check_branch
          %162 = sbr.rel (%p160) target = $region36
        $region35: #{tpu_custom_call.1} parent=31 // pred_region
          %163 = dma.done [#allocation3], 16
        $region36: #{tpu_custom_call.1} parent=31 // pred_fallthru
          _
        %164 = sfence
        %p165 = pneg %p31
        %p166 = pneg %p28
        %p167 = scmp.lt.s32.totalorder %s15, 1
        %s168 = scalar_select %p167, %s15, 1
        %s169 = smul.addr %s168, 8
        %s170 = scalar_lea.vmem %s1, %s169
        %p171 = pneg %p57
        %p172 = pneg %p54
        %p173 = scmp.lt.s32.totalorder %s15, 1
        %s174 = scalar_select %p173, %s15, 1
        %s175 = smul.addr %s174, 8
        %s176 = scalar_lea.vmem %s2, %s175
        %p177 = pneg %p83
        %p178 = pneg %p80
        %p179 = pneg %p109
        %p180 = pneg %p106
        %p181 = scmp.lt.s32.totalorder %s15, 1
        %s182 = scalar_select %p181, %s15, 1
        %s183 = smul.addr %s182, 8
        %s184 = scalar_lea.vmem %s3, %s183
        %p185 = scmp.lt.s32.totalorder %s15, 1
        %s186 = scalar_select %p185, %s15, 1
        %s187 = smul.addr %s186, 8
        %s188 = scalar_lea.vmem %s1, %s187
        %p189 = scmp.lt.s32.totalorder %s15, 1
        %s190 = scalar_select %p189, %s15, 1
        %s191 = smul.addr %s190, 8
        %s192 = scalar_lea.vmem %s2, %s191
        %p193 = scmp.lt.s32.totalorder %s15, 1
        %s194 = scalar_select %p193, %s15, 1
        %s195 = smul.addr %s194, 8
        %s196 = scalar_lea.vmem %s3, %s195
        %s197 = sld [smem:[#allocation2]]
        %s198 = sld [smem:[#allocation2 + $0x1]]
        %v199 = vld [vmem:[%s188] sm:$0xff]
        %v200 = vld [vmem:[%s192] sm:$0xff]
        %v201 = vsub.f32 %v199, %v200
        %v202 = vand.u32 2147483647, %v201
        %vm203 = vcmask 23552
        %v204 = vsel %vm203, %v202, 0.0
        %205 = vadd.xlane.f32.xlu0 %v204
        %v206 = vpop.xlane.xlu0 %205
        %v207 = vstv %s198
        %v208 = vmul.f32 %v207, %v206
        %v209 = vmul.f32 %v208, 1.442695
        %v210 = vpow.pop %v209
        %v211 = vstv %s197
        %v212 = vmul.f32 %v211, %v210
        %vm213 = vcmask 7168
        %214 = vst.msk [vmem:[%s196] sm:$0xff] %vm213, %v212
        %p215 = scmp.lt.s32.totalorder %s15, 1
        %s216 = scalar_select %p215, %s15, 1
        %s217 = smul.addr %s216, 8
        %s218 = scalar_lea.vmem %s3, %s217
        // Predicated region
        $region37: #{tpu_custom_call.1} parent=31 // pred_check
          %p219 = pneg %p106
        $region38: #{tpu_custom_call.1} parent=31 // pred_check_branch
          %221 = sbr.rel (%p219) target = $region40
        $region39: #{tpu_custom_call.1} parent=31 // pred_region
          _
        $region40: #{tpu_custom_call.1} parent=31 // pred_fallthru
          _
      $region32: #{tpu_custom_call.1} parent=5 // pred_fallthru
        _
      %p222 = scmp.le.s32.totalorder 2, %s10
      // Predicated region
      $region41: #{tpu_custom_call.1} parent=5 // pred_check
        %p223 = pneg %p222
      $region42: #{tpu_custom_call.1} parent=5 // pred_check_branch
        %225 = sbr.rel (%p223) target = $region44
      $region43: #{tpu_custom_call.1} parent=5 // pred_region
        %s226 = ssub.s32 %s10, 2
        // Predicated region
        $region45: #{tpu_custom_call.1} parent=43 // pred_check
          %p227 = pneg %p112
        $region46: #{tpu_custom_call.1} parent=43 // pred_check_branch
          %229 = sbr.rel (%p227) target = $region48
        $region47: #{tpu_custom_call.1} parent=43 // pred_region
          %p230 = scmp.lt.s32.totalorder %s16, 1
          %s231 = scalar_select %p230, %s16, 1
          %s232 = smul.addr %s231, 8
          %s233 = scalar_lea.vmem %s3, %s232
        $region48: #{tpu_custom_call.1} parent=43 // pred_fallthru
          _
      $region44: #{tpu_custom_call.1} parent=5 // pred_fallthru
        _
    $region6: #{tpu_custom_call.1} parent=1 // loop_footer
      %s14 = sadd.s32 1, %s10
    $region7: #{tpu_custom_call.1} parent=1 // loop_footer_branch
      %9 = sbr.rel target = $region3
    $region8: #{tpu_custom_call.1} parent=1 // loop_exit
      _
    %234 = vsyncpa [#allocation3], 1
    %s235 = scalar_lea.sflag [#allocation3], 1
    %236 = vsyncpa %s235, 1

</llo_original>
